<compile_context>
chip_gen: v7x
topology: tpu7x:2x2x1
jax: 0.10.0
libtpu: 0.0.40
codegen_flags: <defaults>
</compile_context>

<pallas_src>
import jax
import jax.numpy as jnp
from jax import lax
from jax.experimental import pallas as pl
from jax.experimental.pallas import tpu as pltpu
import numpy as np

_LANE = 128    # lane width of a vreg
_CHUNK = 256   # in-kernel batch sub-chunk (bounds vreg pressure)

# "NT" matmul: contract lhs dim 1 with rhs dim 1 (rhs is batch-major [chunk, D]).
_NT = (((1,), (1,)), ((), ()))


def _trunk(h1_pre, w2_ref, b2_ref, w3_ref, b3_ref, w4_ref, b4_ref):
    """Layers 2-4 on a [32, chunk] pre-activation (batch on lanes)."""
    h = jnp.maximum(h1_pre, 0.0)
    h = jnp.dot(w2_ref[...], h, preferred_element_type=jnp.float32) + b2_ref[...]
    h = jnp.maximum(h, 0.0)                                    # [64, chunk]
    h = jnp.dot(w3_ref[...], h, preferred_element_type=jnp.float32) + b3_ref[...]
    h = jnp.maximum(h, 0.0)                                    # [32, chunk]
    return jnp.dot(w4_ref[...], h, preferred_element_type=jnp.float32) + b4_ref[...]


def _cost_mlp_kernel(x_ref,
                     w1_ref, b1_ref,
                     w2_ref, b2_ref,
                     w3_ref, b3_ref,
                     w4_ref, b4_ref,
                     o_ref):
    # x_ref: [tile, D_in] natural layout, o_ref: [1, tile] lane-dense.
    tile = x_ref.shape[0]
    chunk = min(_CHUNK, tile)
    n_chunks = tile // chunk     # exact by construction (see _pick_tile)

    def body(c, carry):
        start = pl.multiple_of(c * chunk, chunk)
        xb = x_ref[pl.ds(start, chunk), :]                      # [chunk, D_in]
        # First layer as an NT matmul: W1[32, D] x x[chunk, D] over D -> [32, chunk].
        # Batch lands on the lane axis with no explicit transpose of the input.
        h1 = lax.dot_general(w1_ref[...], xb, _NT,
                             preferred_element_type=jnp.float32) + b1_ref[...]
        out = _trunk(h1, w2_ref, b2_ref, w3_ref, b3_ref, w4_ref, b4_ref)
        o_ref[:, pl.ds(start, chunk)] = out.astype(o_ref.dtype)  # [1, chunk]
        return carry

    lax.fori_loop(0, n_chunks, body, 0, unroll=True)


def _cost_mlp_cat_kernel(xo_ref, xl_ref, xf_ref,
                         w1o_ref, w1l_ref, w1f_ref, b1_ref,
                         w2_ref, b2_ref,
                         w3_ref, b3_ref,
                         w4_ref, b4_ref,
                         o_ref):
    # Concat is folded into the first layer: sum of three partial NT matmuls.
    tile = xo_ref.shape[0]
    chunk = min(_CHUNK, tile)
    n_chunks = tile // chunk

    def body(c, carry):
        start = pl.multiple_of(c * chunk, chunk)
        xo = xo_ref[pl.ds(start, chunk), :]
        xl = xl_ref[pl.ds(start, chunk), :]
        xf = xf_ref[pl.ds(start, chunk), :]
        h1 = (lax.dot_general(w1o_ref[...], xo, _NT, preferred_element_type=jnp.float32)
              + lax.dot_general(w1l_ref[...], xl, _NT, preferred_element_type=jnp.float32)
              + lax.dot_general(w1f_ref[...], xf, _NT, preferred_element_type=jnp.float32)
              + b1_ref[...])
        out = _trunk(h1, w2_ref, b2_ref, w3_ref, b3_ref, w4_ref, b4_ref)
        o_ref[:, pl.ds(start, chunk)] = out.astype(o_ref.dtype)
        return carry

    lax.fori_loop(0, n_chunks, body, 0, unroll=True)


def _pick_tile(b_pad, tile_m):
    """Lane-aligned batch tile, <= b_pad, multiple of _CHUNK when larger than it,
    and split so the grid has >= 2 steps when the batch allows (v7x: 2 TCs)."""
    tile = min(tile_m, (b_pad // _LANE) * _LANE)
    if tile > _CHUNK:
        tile = (tile // _CHUNK) * _CHUNK
    if tile >= b_pad and b_pad >= 2 * _LANE:
        tile = max(_LANE, ((tile // 2) // _LANE) * _LANE)
        if tile > _CHUNK:
            tile = (tile // _CHUNK) * _CHUNK
    return tile


def _pad_rows(x, b_pad):
    B = x.shape[0]
    if b_pad == B:
        return x
    return jnp.pad(x, ((0, b_pad - B), (0, 0)))


def _resident(arr):
    # Tiny weights/biases: same block every grid step -> stay VMEM-resident.
    return pl.BlockSpec(arr.shape, lambda i: (0, 0))


def _cost_estimate(b, d_in, params):
    flops = 2 * b * (d_in * 32 + 32 * 64 + 64 * 32 + 32 * 1)
    param_bytes = sum(int(np.prod(p.shape)) * p.dtype.itemsize for p in params.values())
    return pl.CostEstimate(flops=flops, transcendentals=0,
                           bytes_accessed=b * d_in * 4 + b * 4 + param_bytes)


def cost_forward(obs_act, params, *, tile_m=2048):
    """Cost.forward: obs_act [B, D_in] -> [B, 1] via one fused Pallas kernel.

    Weights may be f32 or bf16 (pass bf16 arrays directly to halve input HBM
    bytes); accumulation stays f32 in-kernel.
    """
    B, D_in = obs_act.shape
    w1, b1 = params["w1"], params["b1"]
    w2, b2 = params["w2"], params["b2"]
    w3, b3 = params["w3"], params["b3"]
    w4, b4 = params["w4"], params["b4"]

    # Only tiny batches (< one lane tile) get padded (<= ~11 KB); everything
    # else is DMA'd in place with a masked trailing block.
    b_pad = max(B, _LANE)
    x = _pad_rows(obs_act, b_pad)
    tile = _pick_tile(b_pad, tile_m)
    grid = (pl.cdiv(b_pad, tile),)

    out = pl.pallas_call(
        _cost_mlp_kernel,
        out_shape=jax.ShapeDtypeStruct((1, b_pad), jnp.float32),
        grid_spec=pl.GridSpec(
            grid=grid,
            in_specs=[
                pl.BlockSpec((tile, D_in), lambda i: (i, 0)),   # natural [B, D] layout
                _resident(w1), _resident(b1),
                _resident(w2), _resident(b2),
                _resident(w3), _resident(b3),
                _resident(w4), _resident(b4),
            ],
            out_specs=pl.BlockSpec((1, tile), lambda i: (0, i)),
        ),
        compiler_params=pltpu.CompilerParams(dimension_semantics=("parallel",)),
        cost_estimate=_cost_estimate(b_pad, D_in, params),
    )(x, w1, b1, w2, b2, w3, b3, w4, b4)

    # Lane-dense [1, b_pad] -> [B, 1] column (free layout plumbing).
    return out[0, :B].reshape(B, 1)


def cost_cat_forward(obs, leader_act, follower_act, params, *, dim=1, tile_m=2048):
    """Cost.cat_forward: concat is folded into the kernel (no jnp.concatenate)."""
    assert dim in (1, -1), "cat_forward concatenates along the feature axis"
    B, d_obs = obs.shape
    _, d_act = leader_act.shape
    assert follower_act.shape == (B, d_act)
    d_in = d_obs + 2 * d_act

    w1, b1 = params["w1"], params["b1"]
    w2, b2 = params["w2"], params["b2"]
    w3, b3 = params["w3"], params["b3"]
    w4, b4 = params["w4"], params["b4"]
    # Split W1 column-wise (tiny slices) so the concat never materializes.
    w1o = w1[:, :d_obs]
    w1l = w1[:, d_obs:d_obs + d_act]
    w1f = w1[:, d_obs + d_act:]

    b_pad = max(B, _LANE)
    xo = _pad_rows(obs, b_pad)
    xl = _pad_rows(leader_act, b_pad)
    xf = _pad_rows(follower_act, b_pad)
    tile = _pick_tile(b_pad, tile_m)
    grid = (pl.cdiv(b_pad, tile),)

    out = pl.pallas_call(
        _cost_mlp_cat_kernel,
        out_shape=jax.ShapeDtypeStruct((1, b_pad), jnp.float32),
        grid_spec=pl.GridSpec(
            grid=grid,
            in_specs=[
                pl.BlockSpec((tile, d_obs), lambda i: (i, 0)),
                pl.BlockSpec((tile, d_act), lambda i: (i, 0)),
                pl.BlockSpec((tile, d_act), lambda i: (i, 0)),
                _resident(w1o), _resident(w1l), _resident(w1f), _resident(b1),
                _resident(w2), _resident(b2),
                _resident(w3), _resident(b3),
                _resident(w4), _resident(b4),
            ],
            out_specs=pl.BlockSpec((1, tile), lambda i: (0, i)),
        ),
        compiler_params=pltpu.CompilerParams(dimension_semantics=("parallel",)),
        cost_estimate=_cost_estimate(b_pad, d_in, params),
    )(xo, xl, xf, w1o, w1l, w1f, b1, w2, b2, w3, b3, w4, b4)

    return out[0, :B].reshape(B, 1)


def init_cost_params(key, dim_observation, dim_action):
    """Deterministic synthetic init matching nn.Linear's uniform bound.

    Weights stored PyTorch-native [out, in]; biases [out, 1].
    """
    d_in = dim_observation + dim_action * 2
    dims = [(d_in, 32), (32, 64), (64, 32), (32, 1)]
    params = {}
    for idx, (fi, fo) in enumerate(dims, start=1):
        key, kw, kb = jax.random.split(key, 3)
        bound = 1.0 / np.sqrt(fi)
        params[f"w{idx}"] = jax.random.uniform(
            kw, (fo, fi), dtype=jnp.float32, minval=-bound, maxval=bound)
        params[f"b{idx}"] = jax.random.uniform(
            kb, (fo, 1), dtype=jnp.float32, minval=-bound, maxval=bound)
    return params


def cost_forward_ref(obs_act, params):
    h = jax.nn.relu(obs_act @ params["w1"].T + params["b1"].T)
    h = jax.nn.relu(h @ params["w2"].T + params["b2"].T)
    h = jax.nn.relu(h @ params["w3"].T + params["b3"].T)
    return h @ params["w4"].T + params["b4"].T


if __name__ == "__main__":
    key = jax.random.PRNGKey(0)

    dim_observation = 12
    dim_action = 5
    batch = 8
    d_in = dim_observation + 2 * dim_action  # 22

    key, k_obs, k_la, k_fa, k_params = jax.random.split(key, 5)
    obs = jax.random.normal(k_obs, (batch, dim_observation), dtype=jnp.float32)
    leader_act = jax.random.normal(k_la, (batch, dim_action), dtype=jnp.float32)
    follower_act = jax.random.normal(k_fa, (batch, dim_action), dtype=jnp.float32)

    params = init_cost_params(k_params, dim_observation, dim_action)

    obs_act = jnp.concatenate([obs, leader_act, follower_act], axis=1)
    assert obs_act.shape == (batch, d_in)
    ref = cost_forward_ref(obs_act, params)

    # forward(obs_act)
    out = cost_forward(obs_act, params)
    out = jax.block_until_ready(out)
    np.testing.assert_allclose(np.asarray(out), np.asarray(ref),
                               rtol=1e-5, atol=1e-5)
    assert out.shape == (batch, 1)

    # cat_forward(obs, leader_act, follower_act) — concat folded into the kernel
    out_cat = cost_cat_forward(obs, leader_act, follower_act, params)
    out_cat = jax.block_until_ready(out_cat)
    np.testing.assert_allclose(np.asarray(out_cat), np.asarray(ref),
                               rtol=1e-5, atol=1e-5)
    assert out_cat.shape == (batch, 1)

    print("KERNEL_OK")
</pallas_src>

<mosaic_0001>
module attributes {stable_mosaic.version = 11 : i64} {
  func.func @_cost_mlp_kernel(%arg0: i32, %arg1: memref<128x22xf32, #tpu.memory_space<vmem>>, %arg2: memref<32x22xf32, #tpu.memory_space<vmem>>, %arg3: memref<32x1xf32, #tpu.memory_space<vmem>>, %arg4: memref<64x32xf32, #tpu.memory_space<vmem>>, %arg5: memref<64x1xf32, #tpu.memory_space<vmem>>, %arg6: memref<32x64xf32, #tpu.memory_space<vmem>>, %arg7: memref<32x1xf32, #tpu.memory_space<vmem>>, %arg8: memref<1x32xf32, #tpu.memory_space<vmem>>, %arg9: memref<1x1xf32, #tpu.memory_space<vmem>>, %arg10: memref<1x128xf32, #tpu.memory_space<vmem>>) attributes {dimension_semantics = [#tpu.dimension_semantics<parallel>], iteration_bounds = array<i64: 1>, scalar_prefetch = 0 : i64, scratch_operands = 0 : i64, tpu.core_type = #tpu.core_type<tc>, window_params = [{transform_indices = @transform_0, window_bounds = array<i64: 128, 22>}, {pipeline_mode = #tpu.pipeline_mode<synchronous>, transform_indices = @transform_1, window_bounds = array<i64: 32, 22>}, {pipeline_mode = #tpu.pipeline_mode<synchronous>, transform_indices = @transform_2, window_bounds = array<i64: 32, 1>}, {pipeline_mode = #tpu.pipeline_mode<synchronous>, transform_indices = @transform_3, window_bounds = array<i64: 64, 32>}, {pipeline_mode = #tpu.pipeline_mode<synchronous>, transform_indices = @transform_4, window_bounds = array<i64: 64, 1>}, {pipeline_mode = #tpu.pipeline_mode<synchronous>, transform_indices = @transform_5, window_bounds = array<i64: 32, 64>}, {pipeline_mode = #tpu.pipeline_mode<synchronous>, transform_indices = @transform_6, window_bounds = array<i64: 32, 1>}, {pipeline_mode = #tpu.pipeline_mode<synchronous>, transform_indices = @transform_7, window_bounds = array<i64: 1, 32>}, {pipeline_mode = #tpu.pipeline_mode<synchronous>, transform_indices = @transform_8, window_bounds = array<i64: 1, 1>}, {transform_indices = @transform_9, window_bounds = array<i64: 1, 128>}]} {
    %c0_i32 = arith.constant 0 : i32
    %c128_i32 = arith.constant 128 : i32
    %0 = arith.muli %c0_i32, %c128_i32 : i32
    %1 = tpu.assume_multiple %0, 128 : i32
    %2 = arith.index_cast %1 : i32 to index
    %c0 = arith.constant 0 : index
    %3 = vector.load %arg1[%2, %c0] : memref<128x22xf32, #tpu.memory_space<vmem>>, vector<128x22xf32>
    %c0_0 = arith.constant 0 : index
    %c0_1 = arith.constant 0 : index
    %4 = vector.load %arg2[%c0_0, %c0_1] : memref<32x22xf32, #tpu.memory_space<vmem>>, vector<32x22xf32>
    %cst = arith.constant dense<0.000000e+00> : vector<32x128xf32>
    %5 = tpu.matmul %4, %3, %cst {dimension_numbers = #tpu.dot_dimension_numbers<[1], [1], [0], [0], [0, 0, 1, 0], [], []>} : vector<32x22xf32>, vector<128x22xf32>, vector<32x128xf32> -> vector<32x128xf32>
    %c0_2 = arith.constant 0 : index
    %c0_3 = arith.constant 0 : index
    %6 = vector.load %arg3[%c0_2, %c0_3] : memref<32x1xf32, #tpu.memory_space<vmem>>, vector<32x1xf32>
    %7 = vector.broadcast %6 : vector<32x1xf32> to vector<32x128xf32>
    %8 = arith.addf %5, %7 : vector<32x128xf32>
    %cst_4 = arith.constant 0.000000e+00 : f32
    %9 = vector.broadcast %cst_4 : f32 to vector<32x128xf32>
    %10 = arith.maximumf %8, %9 : vector<32x128xf32>
    %c0_5 = arith.constant 0 : index
    %c0_6 = arith.constant 0 : index
    %11 = vector.load %arg4[%c0_5, %c0_6] : memref<64x32xf32, #tpu.memory_space<vmem>>, vector<64x32xf32>
    %cst_7 = arith.constant dense<0.000000e+00> : vector<64x128xf32>
    %12 = tpu.matmul %11, %10, %cst_7 {dimension_numbers = #tpu.dot_dimension_numbers<[1], [0], [0], [1], [0, 0, 1, 1], [], []>} : vector<64x32xf32>, vector<32x128xf32>, vector<64x128xf32> -> vector<64x128xf32>
    %c0_8 = arith.constant 0 : index
    %c0_9 = arith.constant 0 : index
    %13 = vector.load %arg5[%c0_8, %c0_9] : memref<64x1xf32, #tpu.memory_space<vmem>>, vector<64x1xf32>
    %14 = vector.broadcast %13 : vector<64x1xf32> to vector<64x128xf32>
    %15 = arith.addf %12, %14 : vector<64x128xf32>
    %cst_10 = arith.constant 0.000000e+00 : f32
    %16 = vector.broadcast %cst_10 : f32 to vector<64x128xf32>
    %17 = arith.maximumf %15, %16 : vector<64x128xf32>
    %c0_11 = arith.constant 0 : index
    %c0_12 = arith.constant 0 : index
    %18 = vector.load %arg6[%c0_11, %c0_12] : memref<32x64xf32, #tpu.memory_space<vmem>>, vector<32x64xf32>
    %cst_13 = arith.constant dense<0.000000e+00> : vector<32x128xf32>
    %19 = tpu.matmul %18, %17, %cst_13 {dimension_numbers = #tpu.dot_dimension_numbers<[1], [0], [0], [1], [0, 0, 1, 1], [], []>} : vector<32x64xf32>, vector<64x128xf32>, vector<32x128xf32> -> vector<32x128xf32>
    %c0_14 = arith.constant 0 : index
    %c0_15 = arith.constant 0 : index
    %20 = vector.load %arg7[%c0_14, %c0_15] : memref<32x1xf32, #tpu.memory_space<vmem>>, vector<32x1xf32>
    %21 = vector.broadcast %20 : vector<32x1xf32> to vector<32x128xf32>
    %22 = arith.addf %19, %21 : vector<32x128xf32>
    %cst_16 = arith.constant 0.000000e+00 : f32
    %23 = vector.broadcast %cst_16 : f32 to vector<32x128xf32>
    %24 = arith.maximumf %22, %23 : vector<32x128xf32>
    %c0_17 = arith.constant 0 : index
    %c0_18 = arith.constant 0 : index
    %25 = vector.load %arg8[%c0_17, %c0_18] : memref<1x32xf32, #tpu.memory_space<vmem>>, vector<1x32xf32>
    %cst_19 = arith.constant dense<0.000000e+00> : vector<1x128xf32>
    %26 = tpu.matmul %25, %24, %cst_19 {dimension_numbers = #tpu.dot_dimension_numbers<[1], [0], [0], [1], [0, 0, 1, 1], [], []>} : vector<1x32xf32>, vector<32x128xf32>, vector<1x128xf32> -> vector<1x128xf32>
    %c0_20 = arith.constant 0 : index
    %c0_21 = arith.constant 0 : index
    %27 = vector.load %arg9[%c0_20, %c0_21] : memref<1x1xf32, #tpu.memory_space<vmem>>, vector<1x1xf32>
    %28 = vector.broadcast %27 : vector<1x1xf32> to vector<1x128xf32>
    %29 = arith.addf %26, %28 : vector<1x128xf32>
    %c0_22 = arith.constant 0 : index
    %30 = arith.index_cast %1 : i32 to index
    %31 = vector.load %arg10[%c0_22, %30] : memref<1x128xf32, #tpu.memory_space<vmem>>, vector<1x128xf32>
    tpu.vector_store %arg10[%c0_22, %30], %29 {strides = array<i32>} : memref<1x128xf32, #tpu.memory_space<vmem>>, vector<1x128xf32>,
    %c1_i32 = arith.constant 1 : i32
    return
  }
  func.func @transform_0(%arg0: i32) -> (i32, i32) {
    %c0_i32 = arith.constant 0 : i32
    %c0_i32_0 = arith.constant 0 : i32
    return %arg0, %c0_i32 : i32, i32
  }
  func.func @transform_1(%arg0: i32) -> (i32, i32) {
    %c0_i32 = arith.constant 0 : i32
    %c0_i32_0 = arith.constant 0 : i32
    %c0_i32_1 = arith.constant 0 : i32
    return %c0_i32, %c0_i32_0 : i32, i32
  }
  func.func @transform_2(%arg0: i32) -> (i32, i32) {
    %c0_i32 = arith.constant 0 : i32
    %c0_i32_0 = arith.constant 0 : i32
    %c0_i32_1 = arith.constant 0 : i32
    return %c0_i32, %c0_i32_0 : i32, i32
  }
  func.func @transform_3(%arg0: i32) -> (i32, i32) {
    %c0_i32 = arith.constant 0 : i32
    %c0_i32_0 = arith.constant 0 : i32
    %c0_i32_1 = arith.constant 0 : i32
    return %c0_i32, %c0_i32_0 : i32, i32
  }
  func.func @transform_4(%arg0: i32) -> (i32, i32) {
    %c0_i32 = arith.constant 0 : i32
    %c0_i32_0 = arith.constant 0 : i32
    %c0_i32_1 = arith.constant 0 : i32
    return %c0_i32, %c0_i32_0 : i32, i32
  }
  func.func @transform_5(%arg0: i32) -> (i32, i32) {
    %c0_i32 = arith.constant 0 : i32
    %c0_i32_0 = arith.constant 0 : i32
    %c0_i32_1 = arith.constant 0 : i32
    return %c0_i32, %c0_i32_0 : i32, i32
  }
  func.func @transform_6(%arg0: i32) -> (i32, i32) {
    %c0_i32 = arith.constant 0 : i32
    %c0_i32_0 = arith.constant 0 : i32
    %c0_i32_1 = arith.constant 0 : i32
    return %c0_i32, %c0_i32_0 : i32, i32
  }
  func.func @transform_7(%arg0: i32) -> (i32, i32) {
    %c0_i32 = arith.constant 0 : i32
    %c0_i32_0 = arith.constant 0 : i32
    %c0_i32_1 = arith.constant 0 : i32
    return %c0_i32, %c0_i32_0 : i32, i32
  }
  func.func @transform_8(%arg0: i32) -> (i32, i32) {
    %c0_i32 = arith.constant 0 : i32
    %c0_i32_0 = arith.constant 0 : i32
    %c0_i32_1 = arith.constant 0 : i32
    return %c0_i32, %c0_i32_0 : i32, i32
  }
  func.func @transform_9(%arg0: i32) -> (i32, i32) {
    %c0_i32 = arith.constant 0 : i32
    %c0_i32_0 = arith.constant 0 : i32
    return %c0_i32, %arg0 : i32, i32
  }
}

</mosaic_0001>

<llo_original>
// kernel: tpu_custom_call.1
$region0: #{tpu_custom_call.1}
  #allocation0 [shape = 'u32[]', space=smem, size = 0x4, offset = 0x4, fixed_abs, tag = 'smem constant byte address 0x4 - core index']
  #allocation1 [shape = 'u32[144,128]{1,0:T(1,128)}', space=vmem, size = 0x12000, scoped, tag = 'internal scratch']
  #allocation2 [shape = 'f32[1,1]{1,0:T(1,128)S(1)}', space=vmem, size = 0x200, scoped, tag = 'scoped memory for tpu_custom_call.1']
  %s0 = inlined_call_operand.vmem [shape: f32[128,22], index: 0, kind: input, shape index: {}]
  %s1 = inlined_call_operand.vmem [shape: f32[32,22], index: 1, kind: input, shape index: {}]
  %s2 = inlined_call_operand.vmem [shape: f32[32,1], index: 2, kind: input, shape index: {}]
  %s3 = inlined_call_operand.vmem [shape: f32[64,32], index: 3, kind: input, shape index: {}]
  %s4 = inlined_call_operand.vmem [shape: f32[64,1], index: 4, kind: input, shape index: {}]
  %s5 = inlined_call_operand.vmem [shape: f32[32,64], index: 5, kind: input, shape index: {}]
  %s6 = inlined_call_operand.vmem [shape: f32[32,1], index: 6, kind: input, shape index: {}]
  %s7 = inlined_call_operand.vmem [shape: f32[1,32], index: 7, kind: input, shape index: {}]
  %s8 = inlined_call_operand.<no memory space> [shape: f32[1,1], index: 8, kind: input, shape index: {}]
  %s9 = inlined_call_operand.hbm [shape: f32[1,128], index: 9, kind: output, shape index: {}]
  %s10 = sld [smem:[#allocation0]]
  $region46: #{tpu_custom_call.1} parent=0
    _
  %s12 = ssub.s32 1, %s10
  %s13 = scalar_select 0, %s12, %s10
  %v14 = vstv %s8
  %15 = vst [vmem:[#allocation2] sm:$0x1] %v14
  $region1: #{tpu_custom_call.1} parent=0
    #allocation3 [shape = 'u8[512]{0}', space=vmem, size = 0x400, scoped, tag = 'output window, operand 0, single buffered']
    #allocation4 [shape = 's32[1]{0}', space=sflag, size = 0x4, scoped, tag = 'scoped memory for tpu_custom_call.1']
    %16 = vsyncpa [#allocation4], 0
    // Predicated region
    $region2: #{tpu_custom_call.1} parent=1 // pred_check
      _
    $region3: #{tpu_custom_call.1} parent=1 // pred_check_branch
      %18 = sbr.rel (0) target = $region5
    $region4: #{tpu_custom_call.1} parent=1 // pred_region
      _
    $region5: #{tpu_custom_call.1} parent=1 // pred_fallthru
      _
    // Predicated region
    $region6: #{tpu_custom_call.1} parent=1 // pred_check
      _
    $region7: #{tpu_custom_call.1} parent=1 // pred_check_branch
      %20 = sbr.rel (0) target = $region9
    $region8: #{tpu_custom_call.1} parent=1 // pred_region
      _
    $region9: #{tpu_custom_call.1} parent=1 // pred_fallthru
      _
    // Predicated region
    $region10: #{tpu_custom_call.1} parent=1 // pred_check
      _
    $region11: #{tpu_custom_call.1} parent=1 // pred_check_branch
      %22 = sbr.rel (0) target = $region13
    $region12: #{tpu_custom_call.1} parent=1 // pred_region
      _
    $region13: #{tpu_custom_call.1} parent=1 // pred_fallthru
      _
    // Predicated region
    $region14: #{tpu_custom_call.1} parent=1 // pred_check
      _
    $region15: #{tpu_custom_call.1} parent=1 // pred_check_branch
      %24 = sbr.rel (0) target = $region17
    $region16: #{tpu_custom_call.1} parent=1 // pred_region
      _
    $region17: #{tpu_custom_call.1} parent=1 // pred_fallthru
      _
    // Predicated region
    $region18: #{tpu_custom_call.1} parent=1 // pred_check
      _
    $region19: #{tpu_custom_call.1} parent=1 // pred_check_branch
      %26 = sbr.rel (0) target = $region21
    $region20: #{tpu_custom_call.1} parent=1 // pred_region
      _
    $region21: #{tpu_custom_call.1} parent=1 // pred_fallthru
      _
    // Predicated region
    $region22: #{tpu_custom_call.1} parent=1 // pred_check
      _
    $region23: #{tpu_custom_call.1} parent=1 // pred_check_branch
      %28 = sbr.rel (0) target = $region25
    $region24: #{tpu_custom_call.1} parent=1 // pred_region
      _
    $region25: #{tpu_custom_call.1} parent=1 // pred_fallthru
      _
    // Predicated region
    $region26: #{tpu_custom_call.1} parent=1 // pred_check
      _
    $region27: #{tpu_custom_call.1} parent=1 // pred_check_branch
      %30 = sbr.rel (0) target = $region29
    $region28: #{tpu_custom_call.1} parent=1 // pred_region
      _
    $region29: #{tpu_custom_call.1} parent=1 // pred_fallthru
      _
    // Predicated region
    $region30: #{tpu_custom_call.1} parent=1 // pred_check
      _
    $region31: #{tpu_custom_call.1} parent=1 // pred_check_branch
      %32 = sbr.rel (0) target = $region33
    $region32: #{tpu_custom_call.1} parent=1 // pred_region
      _
    $region33: #{tpu_custom_call.1} parent=1 // pred_fallthru
      _
    // Predicated region
    $region34: #{tpu_custom_call.1} parent=1 // pred_check
      _
    $region35: #{tpu_custom_call.1} parent=1 // pred_check_branch
      %34 = sbr.rel (0) target = $region37
    $region36: #{tpu_custom_call.1} parent=1 // pred_region
      _
    $region37: #{tpu_custom_call.1} parent=1 // pred_fallthru
      _
    %v35 = vld [vmem:[%s0] sm:$0xff]
    %v36 = vld [vmem:[%s0 + $0x8] sm:$0xff]
    %v37 = vld [vmem:[%s0 + $0x10] sm:$0xff]
    %v38 = vld [vmem:[%s0 + $0x18] sm:$0xff]
    %v39 = vld [vmem:[%s0 + $0x20] sm:$0xff]
    %v40 = vld [vmem:[%s0 + $0x28] sm:$0xff]
    %v41 = vld [vmem:[%s0 + $0x30] sm:$0xff]
    %v42 = vld [vmem:[%s0 + $0x38] sm:$0xff]
    %v43 = vld [vmem:[%s0 + $0x40] sm:$0xff]
    %v44 = vld [vmem:[%s0 + $0x48] sm:$0xff]
    %v45 = vld [vmem:[%s0 + $0x50] sm:$0xff]
    %v46 = vld [vmem:[%s0 + $0x58] sm:$0xff]
    %v47 = vld [vmem:[%s0 + $0x60] sm:$0xff]
    %v48 = vld [vmem:[%s0 + $0x68] sm:$0xff]
    %v49 = vld [vmem:[%s0 + $0x70] sm:$0xff]
    %v50 = vld [vmem:[%s0 + $0x78] sm:$0xff]
    %v51 = vld [vmem:[%s1] sm:$0xff]
    %v52 = vld [vmem:[%s1 + $0x8] sm:$0xff]
    %v53 = vld [vmem:[%s1 + $0x10] sm:$0xff]
    %v54 = vld [vmem:[%s1 + $0x18] sm:$0xff]
    %v55 = vld [vmem:[%s2] sm:$0xff]
    %v56 = vld [vmem:[%s2 + $0x8] sm:$0xff]
    %v57 = vld [vmem:[%s2 + $0x10] sm:$0xff]
    %v58 = vld [vmem:[%s2 + $0x18] sm:$0xff]
    %60 = vset.pattern.permute.xlu0 0
    %61 = vperm.xlu0 %60, %v55
    %v62 = vpop.permute.xlu0 %61
    %65 = vset.pattern.permute.xlu0 0
    %66 = vperm.xlu0 %65, %v56
    %v67 = vpop.permute.xlu0 %66
    %70 = vset.pattern.permute.xlu0 0
    %71 = vperm.xlu0 %70, %v57
    %v72 = vpop.permute.xlu0 %71
    %75 = vset.pattern.permute.xlu0 0
    %76 = vperm.xlu0 %75, %v58
    %v77 = vpop.permute.xlu0 %76
    %vm79 = vcmask 179200
    %v81 = vsel %vm79, %v51, 0
    %v84 = vsel %vm79, %v52, 0
    %v87 = vsel %vm79, %v53, 0
    %v90 = vsel %vm79, %v54, 0
    %v93 = vsel %vm79, %v35, 0
    %v96 = vsel %vm79, %v36, 0
    %v99 = vsel %vm79, %v37, 0
    %v102 = vsel %vm79, %v38, 0
    %v105 = vsel %vm79, %v39, 0
    %v108 = vsel %vm79, %v40, 0
    %v111 = vsel %vm79, %v41, 0
    %v114 = vsel %vm79, %v42, 0
    %v117 = vsel %vm79, %v43, 0
    %v120 = vsel %vm79, %v44, 0
    %v123 = vsel %vm79, %v45, 0
    %v126 = vsel %vm79, %v46, 0
    %v129 = vsel %vm79, %v47, 0
    %v132 = vsel %vm79, %v48, 0
    %v135 = vsel %vm79, %v49, 0
    %v138 = vsel %vm79, %v50, 0
    %140 = vmatprep.subr.mxu0 0.0
    %141 = vmatpush1.xpose.msra.mxu0 %v93
    %142 = vmatprep.subr.mxu0 0.0
    %143 = vmatpush1.xpose.msra.mxu0 %v96
    %144 = vmatprep.subr.mxu0 0.0
    %145 = vmatpush1.xpose.msra.mxu0 %v99
    %146 = vmatprep.subr.mxu0 0.0
    %147 = vmatpush1.xpose.msra.mxu0 %v102
    %148 = vmatprep.subr.mxu0 0.0
    %149 = vmatpush1.xpose.msra.mxu0 %v105
    %150 = vmatprep.subr.mxu0 0.0
    %151 = vmatpush1.xpose.msra.mxu0 %v108
    %152 = vmatprep.subr.mxu0 0.0
    %153 = vmatpush1.xpose.msra.mxu0 %v111
    %154 = vmatprep.subr.mxu0 0.0
    %155 = vmatpush1.xpose.msra.mxu0 %v114
    %156 = vmatprep.subr.mxu0 0.0
    %157 = vmatpush1.xpose.msra.mxu0 %v117
    %158 = vmatprep.subr.mxu0 0.0
    %159 = vmatpush1.xpose.msra.mxu0 %v120
    %160 = vmatprep.subr.mxu0 0.0
    %161 = vmatpush1.xpose.msra.mxu0 %v123
    %162 = vmatprep.subr.mxu0 0.0
    %163 = vmatpush1.xpose.msra.mxu0 %v126
    %164 = vmatprep.subr.mxu0 0.0
    %165 = vmatpush1.xpose.msra.mxu0 %v129
    %166 = vmatprep.subr.mxu0 0.0
    %167 = vmatpush1.xpose.msra.mxu0 %v132
    %168 = vmatprep.subr.mxu0 0.0
    %169 = vmatpush1.xpose.msra.mxu0 %v135
    %170 = vmatprep.subr.mxu0 0.0
    %171 = vmatpush1.xpose.msra.mxu0 %v138
    %172 = vmatprep.subr.mxu0 0.0
    %173 = vmatpush1.xpose.msra.mxu0 0.0
    %174 = vmatprep.subr.mxu0 0.0
    %175 = vmatpush1.xpose.msra.mxu0 0.0
    %176 = vmatprep.subr.mxu0 0.0
    %177 = vmatpush1.xpose.msra.mxu0 0.0
    %178 = vmatprep.subr.mxu0 0.0
    %179 = vmatpush1.xpose.msra.mxu0 0.0
    %180 = vmatprep.subr.mxu0 0.0
    %181 = vmatpush1.xpose.msra.mxu0 0.0
    %182 = vmatprep.subr.mxu0 0.0
    %183 = vmatpush1.xpose.msra.mxu0 0.0
    %184 = vmatprep.subr.mxu0 0.0
    %185 = vmatpush1.xpose.msra.mxu0 0.0
    %186 = vmatprep.subr.mxu0 0.0
    %187 = vmatpush1.xpose.msra.mxu0 0.0
    %188 = vmatprep.subr.mxu0 0.0
    %189 = vmatpush1.xpose.msra.mxu0 0.0
    %190 = vmatprep.subr.mxu0 0.0
    %191 = vmatpush1.xpose.msra.mxu0 0.0
    %192 = vmatprep.subr.mxu0 0.0
    %193 = vmatpush1.xpose.msra.mxu0 0.0
    %194 = vmatprep.subr.mxu0 0.0
    %195 = vmatpush1.xpose.msra.mxu0 0.0
    %196 = vmatprep.subr.mxu0 0.0
    %197 = vmatpush1.xpose.msra.mxu0 0.0
    %198 = vmatprep.subr.mxu0 0.0
    %199 = vmatpush1.xpose.msra.mxu0 0.0
    %200 = vmatprep.subr.mxu0 0.0
    %201 = vmatpush1.xpose.msra.mxu0 0.0
    %202 = vmatprep.subr.mxu0 0.0
    %203 = vmatpush1.xpose.msra.mxu0 0.0
    %204 = vmatprep.mubr.f32.mxu0 0.0
    %205 = vmatmul.mubr.f32.gmra.mrb[0].mxu0 %v81
    %v206 = vpop.f32.mrb[0].mxu0
    %v207 = vadd.f32 %v62, %v206
    %v208 = vpop.f32.mrb[0].mxu0
    %209 = vmatprep.mubr.f32.mxu0 0.0
    %210 = vmatmul.mubr.f32.gmra.mrb[0].mxu0 %v84
    %v211 = vpop.f32.mrb[0].mxu0
    %v212 = vadd.f32 %v67, %v211
    %v213 = vpop.f32.mrb[0].mxu0
    %214 = vmatprep.mubr.f32.mxu0 0.0
    %215 = vmatmul.mubr.f32.gmra.mrb[0].mxu0 %v87
    %v216 = vpop.f32.mrb[0].mxu0
    %v217 = vadd.f32 %v72, %v216
    %v218 = vpop.f32.mrb[0].mxu0
    %219 = vmatprep.mubr.f32.mxu0 0.0
    %220 = vmatmul.mubr.f32.gmra.mrb[0].mxu0 %v90
    %v221 = vpop.f32.mrb[0].mxu0
    %v222 = vadd.f32 %v77, %v221
    %v223 = vpop.f32.mrb[0].mxu0
    %224 = vdwg.mxu0
    %v225 = vmax.f32 %v207, 0.0
    %v226 = vmax.f32 %v212, 0.0
    %v227 = vmax.f32 %v217, 0.0
    %v228 = vmax.f32 %v222, 0.0
    %v229 = vld [vmem:[%s3] sm:$0xff]
    %v230 = vld [vmem:[%s3 + $0x8] sm:$0xff]
    %v231 = vld [vmem:[%s3 + $0x10] sm:$0xff]
    %v232 = vld [vmem:[%s3 + $0x18] sm:$0xff]
    %v233 = vld [vmem:[%s3 + $0x20] sm:$0xff]
    %v234 = vld [vmem:[%s3 + $0x28] sm:$0xff]
    %v235 = vld [vmem:[%s3 + $0x30] sm:$0xff]
    %v236 = vld [vmem:[%s3 + $0x38] sm:$0xff]
    %v237 = vld [vmem:[%s4] sm:$0xff]
    %v238 = vld [vmem:[%s4 + $0x8] sm:$0xff]
    %v239 = vld [vmem:[%s4 + $0x10] sm:$0xff]
    %v240 = vld [vmem:[%s4 + $0x18] sm:$0xff]
    %v241 = vld [vmem:[%s4 + $0x20] sm:$0xff]
    %v242 = vld [vmem:[%s4 + $0x28] sm:$0xff]
    %v243 = vld [vmem:[%s4 + $0x30] sm:$0xff]
    %v244 = vld [vmem:[%s4 + $0x38] sm:$0xff]
    %246 = vset.pattern.permute.xlu0 0
    %247 = vperm.xlu0 %246, %v237
    %v248 = vpop.permute.xlu0 %247
    %251 = vset.pattern.permute.xlu0 0
    %252 = vperm.xlu0 %251, %v238
    %v253 = vpop.permute.xlu0 %252
    %256 = vset.pattern.permute.xlu0 0
    %257 = vperm.xlu0 %256, %v239
    %v258 = vpop.permute.xlu0 %257
    %261 = vset.pattern.permute.xlu0 0
    %262 = vperm.xlu0 %261, %v240
    %v263 = vpop.permute.xlu0 %262
    %266 = vset.pattern.permute.xlu0 0
    %267 = vperm.xlu0 %266, %v241
    %v268 = vpop.permute.xlu0 %267
    %271 = vset.pattern.permute.xlu0 0
    %272 = vperm.xlu0 %271, %v242
    %v273 = vpop.permute.xlu0 %272
    %276 = vset.pattern.permute.xlu0 0
    %277 = vperm.xlu0 %276, %v243
    %v278 = vpop.permute.xlu0 %277
    %281 = vset.pattern.permute.xlu0 0
    %282 = vperm.xlu0 %281, %v244
    %v283 = vpop.permute.xlu0 %282
    %vm285 = vcmask 261120
    %v287 = vsel %vm285, %v229, 0
    %v290 = vsel %vm285, %v230, 0
    %v293 = vsel %vm285, %v231, 0
    %v296 = vsel %vm285, %v232, 0
    %v299 = vsel %vm285, %v233, 0
    %v302 = vsel %vm285, %v234, 0
    %v305 = vsel %vm285, %v235, 0
    %v308 = vsel %vm285, %v236, 0
    %310 = vmatprep.subr.mxu0 0.0
    %311 = vmatpush1.msra.mxu0 %v225
    %312 = vmatprep.subr.mxu0 0.0
    %313 = vmatpush1.msra.mxu0 %v226
    %314 = vmatprep.subr.mxu0 0.0
    %315 = vmatpush1.msra.mxu0 %v227
    %316 = vmatprep.subr.mxu0 0.0
    %317 = vmatpush1.msra.mxu0 %v228
    %318 = vmatprep.subr.mxu0 0.0
    %319 = vmatpush1.msra.mxu0 0.0
    %320 = vmatprep.subr.mxu0 0.0
    %321 = vmatpush1.msra.mxu0 0.0
    %322 = vmatprep.subr.mxu0 0.0
    %323 = vmatpush1.msra.mxu0 0.0
    %324 = vmatprep.subr.mxu0 0.0
    %325 = vmatpush1.msra.mxu0 0.0
    %326 = vmatprep.subr.mxu0 0.0
    %327 = vmatpush1.msra.mxu0 0.0
    %328 = vmatprep.subr.mxu0 0.0
    %329 = vmatpush1.msra.mxu0 0.0
    %330 = vmatprep.subr.mxu0 0.0
    %331 = vmatpush1.msra.mxu0 0.0
    %332 = vmatprep.subr.mxu0 0.0
    %333 = vmatpush1.msra.mxu0 0.0
    %334 = vmatprep.subr.mxu0 0.0
    %335 = vmatpush1.msra.mxu0 0.0
    %336 = vmatprep.subr.mxu0 0.0
    %337 = vmatpush1.msra.mxu0 0.0
    %338 = vmatprep.subr.mxu0 0.0
    %339 = vmatpush1.msra.mxu0 0.0
    %340 = vmatprep.subr.mxu0 0.0
    %341 = vmatpush1.msra.mxu0 0.0
    %342 = vmatprep.subr.mxu0 0.0
    %343 = vmatpush1.msra.mxu0 0.0
    %344 = vmatprep.subr.mxu0 0.0
    %345 = vmatpush1.msra.mxu0 0.0
    %346 = vmatprep.subr.mxu0 0.0
    %347 = vmatpush1.msra.mxu0 0.0
    %348 = vmatprep.subr.mxu0 0.0
    %349 = vmatpush1.msra.mxu0 0.0
    %350 = vmatprep.subr.mxu0 0.0
    %351 = vmatpush1.msra.mxu0 0.0
    %352 = vmatprep.subr.mxu0 0.0
    %353 = vmatpush1.msra.mxu0 0.0
    %354 = vmatprep.subr.mxu0 0.0
    %355 = vmatpush1.msra.mxu0 0.0
    %356 = vmatprep.subr.mxu0 0.0
    %357 = vmatpush1.msra.mxu0 0.0
    %358 = vmatprep.subr.mxu0 0.0
    %359 = vmatpush1.msra.mxu0 0.0
    %360 = vmatprep.subr.mxu0 0.0
    %361 = vmatpush1.msra.mxu0 0.0
    %362 = vmatprep.subr.mxu0 0.0
    %363 = vmatpush1.msra.mxu0 0.0
    %364 = vmatprep.subr.mxu0 0.0
    %365 = vmatpush1.msra.mxu0 0.0
    %366 = vmatprep.subr.mxu0 0.0
    %367 = vmatpush1.msra.mxu0 0.0
    %368 = vmatprep.subr.mxu0 0.0
    %369 = vmatpush1.msra.mxu0 0.0
    %370 = vmatprep.subr.mxu0 0.0
    %371 = vmatpush1.msra.mxu0 0.0
    %372 = vmatprep.subr.mxu0 0.0
    %373 = vmatpush1.msra.mxu0 0.0
    %374 = vmatprep.mubr.f32.mxu0 0.0
    %375 = vmatmul.mubr.f32.gmra.mrb[0].mxu0 %v287
    %v376 = vpop.f32.mrb[0].mxu0
    %v377 = vadd.f32 %v248, %v376
    %v378 = vpop.f32.mrb[0].mxu0
    %379 = vmatprep.mubr.f32.mxu0 0.0
    %380 = vmatmul.mubr.f32.gmra.mrb[0].mxu0 %v290
    %v381 = vpop.f32.mrb[0].mxu0
    %v382 = vadd.f32 %v253, %v381
    %v383 = vpop.f32.mrb[0].mxu0
    %384 = vmatprep.mubr.f32.mxu0 0.0
    %385 = vmatmul.mubr.f32.gmra.mrb[0].mxu0 %v293
    %v386 = vpop.f32.mrb[0].mxu0
    %v387 = vadd.f32 %v258, %v386
    %v388 = vpop.f32.mrb[0].mxu0
    %389 = vmatprep.mubr.f32.mxu0 0.0
    %390 = vmatmul.mubr.f32.gmra.mrb[0].mxu0 %v296
    %v391 = vpop.f32.mrb[0].mxu0
    %v392 = vadd.f32 %v263, %v391
    %v393 = vpop.f32.mrb[0].mxu0
    %394 = vmatprep.mubr.f32.mxu0 0.0
    %395 = vmatmul.mubr.f32.gmra.mrb[0].mxu0 %v299
    %v396 = vpop.f32.mrb[0].mxu0
    %v397 = vadd.f32 %v268, %v396
    %v398 = vpop.f32.mrb[0].mxu0
    %399 = vmatprep.mubr.f32.mxu0 0.0
    %400 = vmatmul.mubr.f32.gmra.mrb[0].mxu0 %v302
    %v401 = vpop.f32.mrb[0].mxu0
    %v402 = vadd.f32 %v273, %v401
    %v403 = vpop.f32.mrb[0].mxu0
    %404 = vmatprep.mubr.f32.mxu0 0.0
    %405 = vmatmul.mubr.f32.gmra.mrb[0].mxu0 %v305
    %v406 = vpop.f32.mrb[0].mxu0
    %v407 = vadd.f32 %v278, %v406
    %v408 = vpop.f32.mrb[0].mxu0
    %409 = vmatprep.mubr.f32.mxu0 0.0
    %410 = vmatmul.mubr.f32.gmra.mrb[0].mxu0 %v308
    %v411 = vpop.f32.mrb[0].mxu0
    %v412 = vadd.f32 %v283, %v411
    %v413 = vpop.f32.mrb[0].mxu0
    %414 = vdwg.mxu0
    %v415 = vmax.f32 %v377, 0.0
    %v416 = vmax.f32 %v382, 0.0
    %v417 = vmax.f32 %v387, 0.0
    %v418 = vmax.f32 %v392, 0.0
    %v419 = vmax.f32 %v397, 0.0
    %v420 = vmax.f32 %v402, 0.0
    %v421 = vmax.f32 %v407, 0.0
    %v422 = vmax.f32 %v412, 0.0
    %v423 = vld [vmem:[%s5] sm:$0xff]
    %v424 = vld [vmem:[%s5 + $0x8] sm:$0xff]
    %v425 = vld [vmem:[%s5 + $0x10] sm:$0xff]
    %v426 = vld [vmem:[%s5 + $0x18] sm:$0xff]
    %v427 = vld [vmem:[%s6] sm:$0xff]
    %v428 = vld [vmem:[%s6 + $0x8] sm:$0xff]
    %v429 = vld [vmem:[%s6 + $0x10] sm:$0xff]
    %v430 = vld [vmem:[%s6 + $0x18] sm:$0xff]
    %432 = vset.pattern.permute.xlu0 0
    %433 = vperm.xlu0 %432, %v427
    %v434 = vpop.permute.xlu0 %433
    %437 = vset.pattern.permute.xlu0 0
    %438 = vperm.xlu0 %437, %v428
    %v439 = vpop.permute.xlu0 %438
    %442 = vset.pattern.permute.xlu0 0
    %443 = vperm.xlu0 %442, %v429
    %v444 = vpop.permute.xlu0 %443
    %447 = vset.pattern.permute.xlu0 0
    %448 = vperm.xlu0 %447, %v430
    %v449 = vpop.permute.xlu0 %448
    %vm451 = vcmask 523264
    %v453 = vsel %vm451, %v423, 0
    %v456 = vsel %vm451, %v424, 0
    %v459 = vsel %vm451, %v425, 0
    %v462 = vsel %vm451, %v426, 0
    %464 = vmatprep.subr.mxu0 0.0
    %465 = vmatpush1.msra.mxu0 %v415
    %466 = vmatprep.subr.mxu0 0.0
    %467 = vmatpush1.msra.mxu0 %v416
    %468 = vmatprep.subr.mxu0 0.0
    %469 = vmatpush1.msra.mxu0 %v417
    %470 = vmatprep.subr.mxu0 0.0
    %471 = vmatpush1.msra.mxu0 %v418
    %472 = vmatprep.subr.mxu0 0.0
    %473 = vmatpush1.msra.mxu0 %v419
    %474 = vmatprep.subr.mxu0 0.0
    %475 = vmatpush1.msra.mxu0 %v420
    %476 = vmatprep.subr.mxu0 0.0
    %477 = vmatpush1.msra.mxu0 %v421
    %478 = vmatprep.subr.mxu0 0.0
    %479 = vmatpush1.msra.mxu0 %v422
    %480 = vmatprep.subr.mxu0 0.0
    %481 = vmatpush1.msra.mxu0 0.0
    %482 = vmatprep.subr.mxu0 0.0
    %483 = vmatpush1.msra.mxu0 0.0
    %484 = vmatprep.subr.mxu0 0.0
    %485 = vmatpush1.msra.mxu0 0.0
    %486 = vmatprep.subr.mxu0 0.0
    %487 = vmatpush1.msra.mxu0 0.0
    %488 = vmatprep.subr.mxu0 0.0
    %489 = vmatpush1.msra.mxu0 0.0
    %490 = vmatprep.subr.mxu0 0.0
    %491 = vmatpush1.msra.mxu0 0.0
    %492 = vmatprep.subr.mxu0 0.0
    %493 = vmatpush1.msra.mxu0 0.0
    %494 = vmatprep.subr.mxu0 0.0
    %495 = vmatpush1.msra.mxu0 0.0
    %496 = vmatprep.subr.mxu0 0.0
    %497 = vmatpush1.msra.mxu0 0.0
    %498 = vmatprep.subr.mxu0 0.0
    %499 = vmatpush1.msra.mxu0 0.0
    %500 = vmatprep.subr.mxu0 0.0
    %501 = vmatpush1.msra.mxu0 0.0
    %502 = vmatprep.subr.mxu0 0.0
    %503 = vmatpush1.msra.mxu0 0.0
    %504 = vmatprep.subr.mxu0 0.0
    %505 = vmatpush1.msra.mxu0 0.0
    %506 = vmatprep.subr.mxu0 0.0
    %507 = vmatpush1.msra.mxu0 0.0
    %508 = vmatprep.subr.mxu0 0.0
    %509 = vmatpush1.msra.mxu0 0.0
    %510 = vmatprep.subr.mxu0 0.0
    %511 = vmatpush1.msra.mxu0 0.0
    %512 = vmatprep.subr.mxu0 0.0
    %513 = vmatpush1.msra.mxu0 0.0
    %514 = vmatprep.subr.mxu0 0.0
    %515 = vmatpush1.msra.mxu0 0.0
    %516 = vmatprep.subr.mxu0 0.0
    %517 = vmatpush1.msra.mxu0 0.0
    %518 = vmatprep.subr.mxu0 0.0
    %519 = vmatpush1.msra.mxu0 0.0
    %520 = vmatprep.subr.mxu0 0.0
    %521 = vmatpush1.msra.mxu0 0.0
    %522 = vmatprep.subr.mxu0 0.0
    %523 = vmatpush1.msra.mxu0 0.0
    %524 = vmatprep.subr.mxu0 0.0
    %525 = vmatpush1.msra.mxu0 0.0
    %526 = vmatprep.subr.mxu0 0.0
    %527 = vmatpush1.msra.mxu0 0.0
    %528 = vmatprep.mubr.f32.mxu0 0.0
    %529 = vmatmul.mubr.f32.gmra.mrb[0].mxu0 %v453
    %v530 = vpop.f32.mrb[0].mxu0
    %v531 = vadd.f32 %v434, %v530
    %v532 = vpop.f32.mrb[0].mxu0
    %533 = vmatprep.mubr.f32.mxu0 0.0
    %534 = vmatmul.mubr.f32.gmra.mrb[0].mxu0 %v456
    %v535 = vpop.f32.mrb[0].mxu0
    %v536 = vadd.f32 %v439, %v535
    %v537 = vpop.f32.mrb[0].mxu0
    %538 = vmatprep.mubr.f32.mxu0 0.0
    %539 = vmatmul.mubr.f32.gmra.mrb[0].mxu0 %v459
    %v540 = vpop.f32.mrb[0].mxu0
    %v541 = vadd.f32 %v444, %v540
    %v542 = vpop.f32.mrb[0].mxu0
    %543 = vmatprep.mubr.f32.mxu0 0.0
    %544 = vmatmul.mubr.f32.gmra.mrb[0].mxu0 %v462
    %v545 = vpop.f32.mrb[0].mxu0
    %v546 = vadd.f32 %v449, %v545
    %v547 = vpop.f32.mrb[0].mxu0
    %548 = vdwg.mxu0
    %v549 = vmax.f32 %v531, 0.0
    %v550 = vmax.f32 %v536, 0.0
    %v551 = vmax.f32 %v541, 0.0
    %v552 = vmax.f32 %v546, 0.0
    %v553 = vld [vmem:[%s7] sm:$0x1]
    %v554 = vld [vmem:[#allocation2] sm:$0x1]
    %556 = vset.pattern.permute.xlu0 0
    %557 = vperm.xlu0 %556, %v554
    %v558 = vpop.permute.xlu0 %557
    %v560 = vlaneseq
    %v561 = vshrl.u32 %v560, 7
    %v562 = vsub.s32 0, %v561
    %v563 = vrot.slane %v558, %v562
    %v565 = vsel %vm285, %v553, 0
    %567 = vmatprep.subr.mxu0 0.0
    %568 = vmatpush1.msra.mxu0 %v549
    %569 = vmatprep.subr.mxu0 0.0
    %570 = vmatpush1.msra.mxu0 %v550
    %571 = vmatprep.subr.mxu0 0.0
    %572 = vmatpush1.msra.mxu0 %v551
    %573 = vmatprep.subr.mxu0 0.0
    %574 = vmatpush1.msra.mxu0 %v552
    %575 = vmatprep.subr.mxu0 0.0
    %576 = vmatpush1.msra.mxu0 0.0
    %577 = vmatprep.subr.mxu0 0.0
    %578 = vmatpush1.msra.mxu0 0.0
    %579 = vmatprep.subr.mxu0 0.0
    %580 = vmatpush1.msra.mxu0 0.0
    %581 = vmatprep.subr.mxu0 0.0
    %582 = vmatpush1.msra.mxu0 0.0
    %583 = vmatprep.subr.mxu0 0.0
    %584 = vmatpush1.msra.mxu0 0.0
    %585 = vmatprep.subr.mxu0 0.0
    %586 = vmatpush1.msra.mxu0 0.0
    %587 = vmatprep.subr.mxu0 0.0
    %588 = vmatpush1.msra.mxu0 0.0
    %589 = vmatprep.subr.mxu0 0.0
    %590 = vmatpush1.msra.mxu0 0.0
    %591 = vmatprep.subr.mxu0 0.0
    %592 = vmatpush1.msra.mxu0 0.0
    %593 = vmatprep.subr.mxu0 0.0
    %594 = vmatpush1.msra.mxu0 0.0
    %595 = vmatprep.subr.mxu0 0.0
    %596 = vmatpush1.msra.mxu0 0.0
    %597 = vmatprep.subr.mxu0 0.0
    %598 = vmatpush1.msra.mxu0 0.0
    %599 = vmatprep.subr.mxu0 0.0
    %600 = vmatpush1.msra.mxu0 0.0
    %601 = vmatprep.subr.mxu0 0.0
    %602 = vmatpush1.msra.mxu0 0.0
    %603 = vmatprep.subr.mxu0 0.0
    %604 = vmatpush1.msra.mxu0 0.0
    %605 = vmatprep.subr.mxu0 0.0
    %606 = vmatpush1.msra.mxu0 0.0
    %607 = vmatprep.subr.mxu0 0.0
    %608 = vmatpush1.msra.mxu0 0.0
    %609 = vmatprep.subr.mxu0 0.0
    %610 = vmatpush1.msra.mxu0 0.0
    %611 = vmatprep.subr.mxu0 0.0
    %612 = vmatpush1.msra.mxu0 0.0
    %613 = vmatprep.subr.mxu0 0.0
    %614 = vmatpush1.msra.mxu0 0.0
    %615 = vmatprep.subr.mxu0 0.0
    %616 = vmatpush1.msra.mxu0 0.0
    %617 = vmatprep.subr.mxu0 0.0
    %618 = vmatpush1.msra.mxu0 0.0
    %619 = vmatprep.subr.mxu0 0.0
    %620 = vmatpush1.msra.mxu0 0.0
    %621 = vmatprep.subr.mxu0 0.0
    %622 = vmatpush1.msra.mxu0 0.0
    %623 = vmatprep.subr.mxu0 0.0
    %624 = vmatpush1.msra.mxu0 0.0
    %625 = vmatprep.subr.mxu0 0.0
    %626 = vmatpush1.msra.mxu0 0.0
    %627 = vmatprep.subr.mxu0 0.0
    %628 = vmatpush1.msra.mxu0 0.0
    %629 = vmatprep.subr.mxu0 0.0
    %630 = vmatpush1.msra.mxu0 0.0
    %631 = vmatprep.mubr.f32.mxu0 0.0
    %632 = vmatmul.mubr.f32.gmra.mrb[0].mxu0 %v565
    %v633 = vpop.f32.mrb[0].mxu0
    %v634 = vadd.f32 %v563, %v633
    %v635 = vpop.f32.mrb[0].mxu0
    %636 = vdwg.mxu0
    %637 = vst [vmem:[#allocation3] sm:$0x1] %v634
    // Predicated region
    $region38: #{tpu_custom_call.1} parent=1 // pred_check
      _
    $region39: #{tpu_custom_call.1} parent=1 // pred_check_branch
      %639 = sbr.rel (0) target = $region41
    $region40: #{tpu_custom_call.1} parent=1 // pred_region
      %s641 = ssub.s32 16, 16
      %642 = vsyncadd [#allocation4], %s641
      %s644 = sshll.u32 [#allocation3], 4
      %s645 = int_to_ptr.vmem [resolvable:$true] %s644
      %647 = dma.vmem_to_hbm [thread:$0]  %s645, 16, %s9, [#allocation4]
    $region41: #{tpu_custom_call.1} parent=1 // pred_fallthru
      _
    // Predicated region
    $region42: #{tpu_custom_call.1} parent=1 // pred_check
      _
    $region43: #{tpu_custom_call.1} parent=1 // pred_check_branch
      %649 = sbr.rel (0) target = $region45
    $region44: #{tpu_custom_call.1} parent=1 // pred_region
      %650 = dma.done [#allocation4], 16
    $region45: #{tpu_custom_call.1} parent=1 // pred_fallthru
      _
    %651 = vsyncpa [#allocation4], 1

</llo_original>
